<compile_context>
chip_gen: v5e
topology: v5e:2x2
jax: 0.10.0
libtpu: 0.0.40
codegen_flags: <defaults>
</compile_context>

<pallas_src>
import functools

import jax
import jax.numpy as jnp
from jax.experimental import pallas as pl
from jax.experimental.pallas import tpu as pltpu


def _round_up(x, m):
    return (x + m - 1) // m * m


def _vmem_capacity_bytes():
    """Physical per-core VMEM; conservative fallback if the query is unavailable."""
    try:
        cap = int(pltpu.get_tpu_info().vmem_capacity_bytes)
        if cap > 0:
            return cap
    except Exception:
        pass
    return 64 * 1024 * 1024  # v7x per-TensorCore VMEM (smallest of v5e/v6e/v7x)


def _mm_bias_prelu_kernel(a_ref, w_ref, p_ref, o_ref):
    """Single-K-step path: MXU result feeds the epilogue directly (no acc scratch).

    a_ref: (tm, K)        bf16 im2col patch tile
    w_ref: (K, Cout_pad)  bf16 conv weight with the BN scale pre-folded
    p_ref: (8, Cout_pad)  f32 packed params (row0 = folded BN bias, row1 = PReLU alpha)
    o_ref: (tm, Cout_pad) bf16 output tile
    """
    y = jnp.dot(a_ref[...], w_ref[...], preferred_element_type=jnp.float32)
    y = y + p_ref[0:1, :]                                            # folded BN bias
    o_ref[...] = jnp.where(y > 0, y, p_ref[1:2, :] * y).astype(o_ref.dtype)  # PReLU


def _mm_bias_prelu_acc_kernel(a_ref, w_ref, p_ref, o_ref, acc_ref):
    """K-tiled path (large K): f32 accumulator scratch lives across the K grid axis."""
    @pl.when(pl.program_id(1) == 0)
    def _():
        acc_ref[...] = jnp.zeros_like(acc_ref)

    acc_ref[...] += jnp.dot(a_ref[...], w_ref[...],
                            preferred_element_type=jnp.float32)

    @pl.when(pl.program_id(1) == pl.num_programs(1) - 1)
    def _():
        y = acc_ref[...] + p_ref[0:1, :]
        o_ref[...] = jnp.where(y > 0, y, p_ref[1:2, :] * y).astype(o_ref.dtype)


@functools.partial(
    jax.jit,
    static_argnames=("stride", "padding", "eps", "tile_m", "out_dtype"))
def conv_block_forward(x, weight, gamma, beta, running_mean, running_var, alpha,
                       *, stride=(1, 1), padding=(0, 0), eps=1e-5,
                       tile_m=512, out_dtype=jnp.bfloat16):
    """x: (N, Cin, H, W) NCHW.  weight: (Cout, Cin, kh, kw).  Returns (N, Cout, Ho, Wo)."""
    N, Cin, H, W = x.shape
    Cout, Cin_w, kh, kw = weight.shape
    assert Cin == Cin_w, "groups != 1 not supported"  # TODO(synk): grouped conv path
    sh, sw = stride
    ph, pw = padding
    Ho = (H + 2 * ph - kh) // sh + 1
    Wo = (W + 2 * pw - kw) // sw + 1

    f32 = jnp.float32

    # ---- fold BatchNorm (eval mode) into the conv weight + a per-channel bias ----
    scale = gamma.astype(f32) * jax.lax.rsqrt(running_var.astype(f32) + eps)
    bias = beta.astype(f32) - running_mean.astype(f32) * scale
    alpha_v = jnp.broadcast_to(jnp.asarray(alpha, f32).reshape(-1), (Cout,))

    # Weight in (i, j, ci) K-order to match the patch layout below; BN scale folded in
    # f32 *before* the bf16 cast.
    w_mat = weight.astype(f32).transpose(2, 3, 1, 0)           # (kh, kw, Cin, Cout)
    w_mat = (w_mat * scale).reshape(kh * kw * Cin, Cout).astype(jnp.bfloat16)

    # ---- im2col glue (plain JAX, bf16), built directly in (i, j, ci) K-order so no
    #      big 5-D transpose is needed afterwards. ----
    # TODO(synk): fuse this extraction into the kernel (halo'd NHWC block per M tile).
    x_nhwc = x.astype(jnp.bfloat16).transpose(0, 2, 3, 1)      # small NCHW->NHWC
    x_pad = jnp.pad(x_nhwc, ((0, 0), (ph, ph), (pw, pw), (0, 0)))
    taps = []
    for i in range(kh):
        for j in range(kw):
            taps.append(x_pad[:, i:i + (Ho - 1) * sh + 1:sh,
                              j:j + (Wo - 1) * sw + 1:sw, :])  # (N, Ho, Wo, Cin)
    patch = jnp.stack(taps, axis=3)                            # (N, Ho, Wo, khkw, Cin)
    patch = patch.reshape(N * Ho * Wo, kh * kw * Cin)

    M, K = patch.shape
    Cout_pad = _round_up(Cout, 128)           # lane-dense output / full MXU N width
    out_bytes = jnp.dtype(out_dtype).itemsize

    # ---- M tiling: balanced tiles; >= 2 tiles when there is enough work so the
    #      "parallel" M axis can split across v7x's two TensorCores. ----
    n_m = max(1, pl.cdiv(M, tile_m))
    if n_m < 2 and M >= 256:
        n_m = 2
    tm = _round_up(pl.cdiv(M, n_m), 16)
    M_pad = _round_up(M, tm)

    # ---- generation-aware VMEM budget & weight residency ----
    vmem_cap = _vmem_capacity_bytes()
    vmem_budget = int(vmem_cap * 0.8)         # ~51 MiB on v7x, ~102 MiB on v5e/v6e

    def _working_set(tk_, with_acc):
        ws = 2 * (tm * max(tk_, 128) * 2          # double-buffered bf16 A tiles
                  + max(tk_, 128) * Cout_pad * 2  # double-buffered bf16 W tiles
                  + 8 * Cout_pad * 4)             # params
        ws += 2 * tm * Cout_pad * out_bytes       # double-buffered output tiles
        if with_acc:
            ws += tm * Cout_pad * 4               # f32 accumulator scratch
        return ws

    if _working_set(K, with_acc=False) <= vmem_budget:
        # Whole K resident: single K step, weight DMA'd once, no accumulator scratch.
        tk, K_pad = K, K
    else:
        # Large K: tile the reduction.  tk=512 halves per-step overhead vs 256 when it
        # adds no padding; sweep pl.Buffered(3) on the A spec if the A DMA is exposed.
        tk = 512 if _round_up(K, 512) == _round_up(K, 256) else 256
        K_pad = _round_up(K, tk)

    patch = jnp.pad(patch, ((0, M_pad - M), (0, K_pad - K)))
    w_mat = jnp.pad(w_mat, ((0, K_pad - K), (0, Cout_pad - Cout)))

    params = jnp.zeros((8, Cout_pad), f32)
    params = params.at[0, :Cout].set(bias)
    params = params.at[1, :Cout].set(alpha_v)

    n_m_actual = M_pad // tm
    n_k = K_pad // tk

    if n_k == 1:
        kernel = _mm_bias_prelu_kernel
        grid = (n_m_actual,)
        in_specs = [pl.BlockSpec((tm, tk), lambda i: (i, 0)),
                    pl.BlockSpec((tk, Cout_pad), lambda i: (0, 0)),
                    pl.BlockSpec((8, Cout_pad), lambda i: (0, 0))]
        out_specs = pl.BlockSpec((tm, Cout_pad), lambda i: (i, 0))
        scratch_shapes = []
        dim_sem = ("parallel",)
        w_reads = 1                               # constant block index: single DMA
    else:
        kernel = _mm_bias_prelu_acc_kernel
        grid = (n_m_actual, n_k)
        in_specs = [pl.BlockSpec((tm, tk), lambda i, k: (i, k)),
                    pl.BlockSpec((tk, Cout_pad), lambda i, k: (k, 0)),
                    pl.BlockSpec((8, Cout_pad), lambda i, k: (0, 0))]
        out_specs = pl.BlockSpec((tm, Cout_pad), lambda i, k: (i, 0))
        scratch_shapes = [pltpu.VMEM((tm, Cout_pad), jnp.float32)]
        dim_sem = ("parallel", "arbitrary")
        w_reads = n_m_actual                      # weight re-read once per M tile

    cost = pl.CostEstimate(
        flops=2 * M_pad * K_pad * Cout_pad,
        transcendentals=0,
        bytes_accessed=(M_pad * K_pad * 2
                        + w_reads * K_pad * Cout_pad * 2
                        + M_pad * Cout_pad * out_bytes
                        + 8 * Cout_pad * 4))

    ws = _working_set(tk, with_acc=(n_k > 1))
    vmem_limit = min(vmem_budget, max(2 * ws, 32 * 1024 * 1024))

    out = pl.pallas_call(
        kernel,
        out_shape=jax.ShapeDtypeStruct((M_pad, Cout_pad), out_dtype),
        grid_spec=pltpu.PrefetchScalarGridSpec(
            num_scalar_prefetch=0,
            grid=grid,
            in_specs=in_specs,
            out_specs=out_specs,
            scratch_shapes=scratch_shapes),
        compiler_params=pltpu.CompilerParams(
            dimension_semantics=dim_sem,
            vmem_limit_bytes=vmem_limit),
        cost_estimate=cost,
    )(patch, w_mat, params)

    out = out[:M, :Cout]                          # drop row + lane padding
    # (N*Ho*Wo, Cout) -> (N, Ho, Wo, Cout) -> NCHW, all in the (bf16) output dtype.
    return out.reshape(N, Ho, Wo, Cout).transpose(0, 3, 1, 2)


def _prelu(y, a):
    return jnp.where(y > 0, y, a * y)


if __name__ == "__main__":
    key = jax.random.PRNGKey(0)
    k_x, k_w, k_g, k_b, k_m, k_v = jax.random.split(key, 6)

    N, Cin, H, W = 2, 4, 16, 16
    Cout, kh, kw = 8, 3, 3
    stride, padding = (1, 1), (1, 1)
    eps = 1e-5

    x = jax.random.normal(k_x, (N, Cin, H, W), dtype=jnp.float32)
    weight = jax.random.normal(k_w, (Cout, Cin, kh, kw), dtype=jnp.float32) * 0.1
    gamma = 1.0 + 0.1 * jax.random.normal(k_g, (Cout,), dtype=jnp.float32)
    beta = 0.1 * jax.random.normal(k_b, (Cout,), dtype=jnp.float32)
    running_mean = 0.1 * jax.random.normal(k_m, (Cout,), dtype=jnp.float32)
    running_var = 1.0 + 0.1 * jax.random.uniform(k_v, (Cout,), dtype=jnp.float32)
    alpha = jnp.full((Cout,), 0.25, dtype=jnp.float32)  # PyTorch PReLU default init

    out = conv_block_forward(x, weight, gamma, beta, running_mean, running_var, alpha,
                             stride=stride, padding=padding, eps=eps)
    out = jax.block_until_ready(out)
    assert out.shape == (N, Cout, H, W), out.shape

    # Reference uses the same bf16-rounded operands the kernel consumes (x and the
    # BN-scale-folded weight), so the check isolates kernel correctness (f32 MXU
    # accumulation + epilogue).  Tolerance covers the bf16 *output* rounding.
    scale = gamma * jax.lax.rsqrt(running_var + eps)
    bias = beta - running_mean * scale
    xq = x.astype(jnp.bfloat16).astype(jnp.float32)
    wq = (weight * scale.reshape(-1, 1, 1, 1)).astype(jnp.bfloat16).astype(jnp.float32)
    y = jax.lax.conv_general_dilated(
        xq, wq, window_strides=stride,
        padding=[(padding[0], padding[0]), (padding[1], padding[1])],
        dimension_numbers=("NCHW", "OIHW", "NCHW"))
    ref = _prelu(y + bias.reshape(1, -1, 1, 1), alpha.reshape(1, -1, 1, 1))

    out32 = out.astype(jnp.float32)
    err = float(jnp.max(jnp.abs(out32 - ref)))
    assert jnp.allclose(out32, ref, atol=2e-2, rtol=2e-2), err
    print("KERNEL_OK")
</pallas_src>

<mosaic_0001>
module attributes {stable_mosaic.version = 11 : i64} {
  func.func @_mm_bias_prelu_kernel(%arg0: i32, %arg1: memref<256x36xbf16, #tpu.memory_space<vmem>>, %arg2: memref<36x128xbf16, #tpu.memory_space<vmem>>, %arg3: memref<8x128xf32, #tpu.memory_space<vmem>>, %arg4: memref<256x128xbf16, #tpu.memory_space<vmem>>) attributes {dimension_semantics = [#tpu.dimension_semantics<parallel>], iteration_bounds = array<i64: 2>, scalar_prefetch = 0 : i64, scratch_operands = 0 : i64, tpu.core_type = #tpu.core_type<tc>, window_params = [{transform_indices = @transform_0, window_bounds = array<i64: 256, 36>}, {pipeline_mode = #tpu.pipeline_mode<synchronous>, transform_indices = @transform_1, window_bounds = array<i64: 36, 128>}, {pipeline_mode = #tpu.pipeline_mode<synchronous>, transform_indices = @transform_2, window_bounds = array<i64: 8, 128>}, {transform_indices = @transform_3, window_bounds = array<i64: 256, 128>}]} {
    %c0 = arith.constant 0 : index
    %c0_0 = arith.constant 0 : index
    %0 = vector.load %arg1[%c0, %c0_0] : memref<256x36xbf16, #tpu.memory_space<vmem>>, vector<256x36xbf16>
    %c0_1 = arith.constant 0 : index
    %c0_2 = arith.constant 0 : index
    %1 = vector.load %arg2[%c0_1, %c0_2] : memref<36x128xbf16, #tpu.memory_space<vmem>>, vector<36x128xbf16>
    %cst = arith.constant dense<0.000000e+00> : vector<256x128xf32>
    %2 = tpu.matmul %0, %1, %cst {dimension_numbers = #tpu.dot_dimension_numbers<[1], [0], [0], [1], [0, 0, 1, 1], [], []>} : vector<256x36xbf16>, vector<36x128xbf16>, vector<256x128xf32> -> vector<256x128xf32>
    %c0_3 = arith.constant 0 : index
    %c0_4 = arith.constant 0 : index
    %3 = vector.load %arg3[%c0_3, %c0_4] : memref<8x128xf32, #tpu.memory_space<vmem>>, vector<1x128xf32>
    %4 = vector.broadcast %3 : vector<1x128xf32> to vector<256x128xf32>
    %5 = arith.addf %2, %4 : vector<256x128xf32>
    %cst_5 = arith.constant 0.000000e+00 : f32
    %6 = vector.broadcast %cst_5 : f32 to vector<256x128xf32>
    %7 = arith.cmpf ogt, %5, %6 : vector<256x128xf32>
    %c1 = arith.constant 1 : index
    %c0_6 = arith.constant 0 : index
    %8 = vector.load %arg3[%c1, %c0_6] : memref<8x128xf32, #tpu.memory_space<vmem>>, vector<1x128xf32>
    %9 = vector.broadcast %8 : vector<1x128xf32> to vector<256x128xf32>
    %10 = arith.mulf %9, %5 : vector<256x128xf32>
    %11 = arith.select %7, %5, %10 : vector<256x128xi1>, vector<256x128xf32>
    %12 = arith.truncf %11 : vector<256x128xf32> to vector<256x128xbf16>
    %c0_7 = arith.constant 0 : index
    %c0_8 = arith.constant 0 : index
    %13 = vector.load %arg4[%c0_7, %c0_8] : memref<256x128xbf16, #tpu.memory_space<vmem>>, vector<256x128xbf16>
    tpu.vector_store %arg4[%c0_7, %c0_8], %12 {strides = array<i32>} : memref<256x128xbf16, #tpu.memory_space<vmem>>, vector<256x128xbf16>,
    return
  }
  func.func @transform_0(%arg0: i32) -> (i32, i32) {
    %c0_i32 = arith.constant 0 : i32
    %c0_i32_0 = arith.constant 0 : i32
    return %arg0, %c0_i32 : i32, i32
  }
  func.func @transform_1(%arg0: i32) -> (i32, i32) {
    %c0_i32 = arith.constant 0 : i32
    %c0_i32_0 = arith.constant 0 : i32
    %c0_i32_1 = arith.constant 0 : i32
    return %c0_i32, %c0_i32_0 : i32, i32
  }
  func.func @transform_2(%arg0: i32) -> (i32, i32) {
    %c0_i32 = arith.constant 0 : i32
    %c0_i32_0 = arith.constant 0 : i32
    %c0_i32_1 = arith.constant 0 : i32
    return %c0_i32, %c0_i32_0 : i32, i32
  }
  func.func @transform_3(%arg0: i32) -> (i32, i32) {
    %c0_i32 = arith.constant 0 : i32
    %c0_i32_0 = arith.constant 0 : i32
    return %arg0, %c0_i32 : i32, i32
  }
}

</mosaic_0001>

<llo_original>
// kernel: conv_block_forward.1
$region0: #{conv_block_forward.1}
  #allocation0 [shape = 'u32[]', space=smem, size = 0x4, offset = 0x4, fixed_abs, tag = 'smem constant byte address 0x4 - core index']
  #allocation1 [shape = 'u32[72,128]{1,0:T(1,128)}', space=vmem, size = 0x9000, scoped, tag = 'internal scratch']
  %s0 = inlined_call_operand.vmem [shape: bf16[512,36], index: 0, kind: input, shape index: {}]
  %s1 = inlined_call_operand.vmem [shape: bf16[36,128], index: 1, kind: input, shape index: {}]
  %s2 = inlined_call_operand.vmem [shape: f32[8,128], index: 2, kind: input, shape index: {}]
  %s3 = inlined_call_operand.vmem [shape: bf16[512,128], index: 3, kind: output, shape index: {}]
  %s4 = sld [smem:[#allocation0]]
  $region45: #{conv_block_forward.1} parent=0
    _
  %s6 = ssub.s32 1, %s4
  %s7 = scalar_select 0, %s6, %s4
  loop: start=0, step=1, limit=4
  $region2: #{conv_block_forward.1} parent=0 // loop_pre_header
    _
  $region3: #{conv_block_forward.1} parent=0 // loop_header
    %s9 = sphi 0, %s13
    %p10 = scmp.ge.s32.totalorder %s9, 4
    %s19 = sphi 0, %s21
    %s22 = sphi 0, %s19
    %s23 = sphi 0, %s22
    %s39 = sphi 0, %s23
    %s43 = sphi 0, %s43
    %s45 = sphi 0, %s43
    %s46 = sphi 0, %s45
    %s60 = sphi 0, %s46
    %s64 = sphi 0, %s64
    %s66 = sphi 0, %s64
    %s67 = sphi 0, %s66
    %s81 = sphi 0, %s67
    %s87 = sphi 0, %s89
    %s90 = sphi 0, %s87
    %s91 = sphi 0, %s90
    %s107 = sphi 0, %s91
  $region4: #{conv_block_forward.1} parent=0 // loop_header_branch
    %12 = sbr.rel (%p10) target = $region8
  $region5: #{conv_block_forward.1} parent=0 // loop_body
    %s14 = ssub.s32 %s9, 1
    %s15 = ssub.s32 %s9, 2
    %s16 = sadd.s32 %s9, 1
    %s17 = ssub.s32 %s9, %s16
    %p18 = scmp.eq.s32.totalorder %s17, 0
    %s20 = sadd.s32 %s19, 1
    %s21 = scalar_select %p18, %s19, %s20
    %p24 = pneg %p18
    %p25 = scmp.eq.s32.totalorder %s9, 1
    %p26 = por %p24, %p25
    %p27 = scmp.ne.s32.totalorder %s19, %s22
    %p28 = scmp.eq.s32.totalorder %s9, 0
    %p29 = por %p27, %p28
    %p30 = scmp.ne.s32.totalorder %s19, %s22
    %p31 = scmp.eq.s32.totalorder %s14, 1
    %p32 = por %p30, %p31
    %p33 = scmp.ne.s32.totalorder %s22, %s23
    %p34 = scmp.eq.s32.totalorder %s14, 0
    %p35 = por %p33, %p34
    %p36 = scmp.ne.s32.totalorder %s22, %s23
    %p37 = scmp.eq.s32.totalorder %s15, 1
    %p38 = por %p36, %p37
    %p40 = scmp.ne.s32.totalorder %s23, %s39
    %p41 = scmp.eq.s32.totalorder %s15, 0
    %p42 = por %p40, %p41
    %s44 = sadd.s32 %s43, 1
    %p47 = scmp.eq.s32.totalorder %s9, 1
    %p48 = scmp.ne.s32.totalorder %s43, %s45
    %p49 = scmp.eq.s32.totalorder %s9, 0
    %p50 = por %p48, %p49
    %p51 = scmp.ne.s32.totalorder %s43, %s45
    %p52 = scmp.eq.s32.totalorder %s14, 1
    %p53 = por %p51, %p52
    %p54 = scmp.ne.s32.totalorder %s45, %s46
    %p55 = scmp.eq.s32.totalorder %s14, 0
    %p56 = por %p54, %p55
    %p57 = scmp.ne.s32.totalorder %s45, %s46
    %p58 = scmp.eq.s32.totalorder %s15, 1
    %p59 = por %p57, %p58
    %p61 = scmp.ne.s32.totalorder %s46, %s60
    %p62 = scmp.eq.s32.totalorder %s15, 0
    %p63 = por %p61, %p62
    %s65 = sadd.s32 %s64, 1
    %p68 = scmp.eq.s32.totalorder %s9, 1
    %p69 = scmp.ne.s32.totalorder %s64, %s66
    %p70 = scmp.eq.s32.totalorder %s9, 0
    %p71 = por %p69, %p70
    %p72 = scmp.ne.s32.totalorder %s64, %s66
    %p73 = scmp.eq.s32.totalorder %s14, 1
    %p74 = por %p72, %p73
    %p75 = scmp.ne.s32.totalorder %s66, %s67
    %p76 = scmp.eq.s32.totalorder %s14, 0
    %p77 = por %p75, %p76
    %p78 = scmp.ne.s32.totalorder %s66, %s67
    %p79 = scmp.eq.s32.totalorder %s15, 1
    %p80 = por %p78, %p79
    %p82 = scmp.ne.s32.totalorder %s67, %s81
    %p83 = scmp.eq.s32.totalorder %s15, 0
    %p84 = por %p82, %p83
    %s85 = ssub.s32 %s9, %s16
    %p86 = scmp.eq.s32.totalorder %s85, 0
    %s88 = sadd.s32 %s87, 1
    %s89 = scalar_select %p86, %s87, %s88
    %p92 = pneg %p86
    %p93 = scmp.eq.s32.totalorder %s9, 1
    %p94 = por %p92, %p93
    %p95 = scmp.ne.s32.totalorder %s87, %s90
    %p96 = scmp.eq.s32.totalorder %s9, 0
    %p97 = por %p95, %p96
    %p98 = scmp.ne.s32.totalorder %s87, %s90
    %p99 = scmp.eq.s32.totalorder %s14, 1
    %p100 = por %p98, %p99
    %p101 = scmp.ne.s32.totalorder %s90, %s91
    %p102 = scmp.eq.s32.totalorder %s14, 0
    %p103 = por %p101, %p102
    %p104 = scmp.ne.s32.totalorder %s90, %s91
    %p105 = scmp.eq.s32.totalorder %s15, 1
    %p106 = por %p104, %p105
    %p108 = scmp.ne.s32.totalorder %s91, %s107
    %p109 = scmp.eq.s32.totalorder %s15, 0
    %p110 = por %p108, %p109
    %p111 = scmp.le.s32.totalorder 1, %s9
    %p112 = scmp.lt.s32.totalorder %s9, 3
    %p113 = pnand %p111, %p112
    %p114 = pneg %p113
    // Predicated region
    $region9: #{conv_block_forward.1} parent=5 // pred_check
      _
    $region10: #{conv_block_forward.1} parent=5 // pred_check_branch
      %116 = sbr.rel (%p113) target = $region12
    $region11: #{conv_block_forward.1} parent=5 // pred_region
      %s117 = ssub.s32 %s9, 1
      // Predicated region
      $region13: #{conv_block_forward.1} parent=11 // pred_check
        %p118 = pneg %p56
      $region14: #{conv_block_forward.1} parent=11 // pred_check_branch
        %120 = sbr.rel (%p118) target = $region16
      $region15: #{conv_block_forward.1} parent=11 // pred_region
        _
      $region16: #{conv_block_forward.1} parent=11 // pred_fallthru
        _
      // Predicated region
      $region17: #{conv_block_forward.1} parent=11 // pred_check
        %p121 = pneg %p77
      $region18: #{conv_block_forward.1} parent=11 // pred_check_branch
        %123 = sbr.rel (%p121) target = $region20
      $region19: #{conv_block_forward.1} parent=11 // pred_region
        _
      $region20: #{conv_block_forward.1} parent=11 // pred_fallthru
        _
    $region12: #{conv_block_forward.1} parent=5 // pred_fallthru
      _
    %p124 = scmp.lt.s32.totalorder %s9, 2
    // Predicated region
    $region21: #{conv_block_forward.1} parent=5 // pred_check
      %p125 = pneg %p124
    $region22: #{conv_block_forward.1} parent=5 // pred_check_branch
      %127 = sbr.rel (%p125) target = $region24
    $region23: #{conv_block_forward.1} parent=5 // pred_region
      // Predicated region
      $region25: #{conv_block_forward.1} parent=23 // pred_check
        %p128 = pneg %p29
      $region26: #{conv_block_forward.1} parent=23 // pred_check_branch
        %130 = sbr.rel (%p128) target = $region28
      $region27: #{conv_block_forward.1} parent=23 // pred_region
        %s131 = smul.u32 32, %s9
        %p132 = scmp.lt.s32.totalorder %s131, 63
        %s133 = scalar_select %p132, %s131, 63
        %s134 = smul.addr %s133, 4
        %s135 = scalar_lea.vmem %s0, %s134
        %s136 = smul.u32 32, %s9
      $region28: #{conv_block_forward.1} parent=23 // pred_fallthru
        _
    $region24: #{conv_block_forward.1} parent=5 // pred_fallthru
      _
    %p137 = scmp.le.s32.totalorder 1, %s9
    %p138 = scmp.lt.s32.totalorder %s9, 3
    %p139 = pnand %p137, %p138
    %p140 = pneg %p139
    // Predicated region
    $region29: #{conv_block_forward.1} parent=5 // pred_check
      _
    $region30: #{conv_block_forward.1} parent=5 // pred_check_branch
      %142 = sbr.rel (%p139) target = $region32
    $region31: #{conv_block_forward.1} parent=5 // pred_region
      %s143 = ssub.s32 %s9, 1
      %s144 = smul.u32 32, %s14
      %p145 = scmp.lt.s32.totalorder %s144, 63
      %s146 = scalar_select %p145, %s144, 63
      %s147 = smul.addr %s146, 4
      %s148 = scalar_lea.vmem %s0, %s147
      %p149 = pneg %p35
      %p150 = pneg %p32
      %p151 = pneg %p56
      %p152 = pneg %p53
      %p153 = pneg %p77
      %p154 = pneg %p74
      %p155 = pneg %p103
      %p156 = pneg %p100
      %s157 = smul.u32 32, %s14
      %p158 = scmp.lt.s32.totalorder %s157, 63
      %s159 = scalar_select %p158, %s157, 63
      %s160 = smul.addr %s159, 4
      %s161 = scalar_lea.vmem %s3, %s160
      %s162 = smul.u32 32, %s14
      %p163 = scmp.lt.s32.totalorder %s162, 63
      %s164 = scalar_select %p163, %s162, 63
      %s165 = smul.addr %s164, 4
      %s166 = scalar_lea.vmem %s0, %s165
      %s167 = smul.u32 32, %s14
      %s168 = smul.u32 32, %s14
      %p169 = scmp.lt.s32.totalorder %s168, 63
      %s170 = scalar_select %p169, %s168, 63
      %s171 = smul.addr %s170, 4
      %s172 = scalar_lea.vmem %s3, %s171
      %s173 = smul.u32 32, %s14
      %v175 = vld [vmem:[%s166] sm:$0xf]
      %v176 = vld [vmem:[%s166 + $0x4] sm:$0xf]
      %v177 = vld [vmem:[%s166 + $0x8] sm:$0xf]
      %v178 = vld [vmem:[%s166 + $0xc] sm:$0xf]
      %v179 = vld [vmem:[%s166 + $0x10] sm:$0xf]
      %v180 = vld [vmem:[%s166 + $0x14] sm:$0xf]
      %v181 = vld [vmem:[%s166 + $0x18] sm:$0xf]
      %v182 = vld [vmem:[%s166 + $0x1c] sm:$0xf]
      %v183 = vld [vmem:[%s166 + $0x20] sm:$0xf]
      %v184 = vld [vmem:[%s166 + $0x24] sm:$0xf]
      %v185 = vld [vmem:[%s166 + $0x28] sm:$0xf]
      %v186 = vld [vmem:[%s166 + $0x2c] sm:$0xf]
      %v187 = vld [vmem:[%s166 + $0x30] sm:$0xf]
      %v188 = vld [vmem:[%s166 + $0x34] sm:$0xf]
      %v189 = vld [vmem:[%s166 + $0x38] sm:$0xf]
      %v190 = vld [vmem:[%s166 + $0x3c] sm:$0xf]
      %v191 = vld [vmem:[%s166 + $0x40] sm:$0xf]
      %v192 = vld [vmem:[%s166 + $0x44] sm:$0xf]
      %v193 = vld [vmem:[%s166 + $0x48] sm:$0xf]
      %v194 = vld [vmem:[%s166 + $0x4c] sm:$0xf]
      %v195 = vld [vmem:[%s166 + $0x50] sm:$0xf]
      %v196 = vld [vmem:[%s166 + $0x54] sm:$0xf]
      %v197 = vld [vmem:[%s166 + $0x58] sm:$0xf]
      %v198 = vld [vmem:[%s166 + $0x5c] sm:$0xf]
      %v199 = vld [vmem:[%s166 + $0x60] sm:$0xf]
      %v200 = vld [vmem:[%s166 + $0x64] sm:$0xf]
      %v201 = vld [vmem:[%s166 + $0x68] sm:$0xf]
      %v202 = vld [vmem:[%s166 + $0x6c] sm:$0xf]
      %v203 = vld [vmem:[%s166 + $0x70] sm:$0xf]
      %v204 = vld [vmem:[%s166 + $0x74] sm:$0xf]
      %v205 = vld [vmem:[%s166 + $0x78] sm:$0xf]
      %v206 = vld [vmem:[%s166 + $0x7c] sm:$0xf]
      %v207 = vld [vmem:[%s1] sm:$0xf]
      %v208 = vld [vmem:[%s1 + $0x4] sm:$0xf]
      %v209 = vld [vmem:[%s1 + $0x8] sm:$0xf]
      %v210 = vld [vmem:[%s1 + $0xc] sm:$0xf]
      %v211 = vld [vmem:[%s1 + $0x10] sm:$0x3]
      %v212 = vld [vmem:[%s2] sm:$0x1]
      %v213 = vperm.slane %v212, 0
      %v246 = vunpack.c.l.b16 %v175
      %v247 = vunpack.c.l.b16 %v176
      %v248 = vunpack.c.l.b16 %v177
      %v249 = vunpack.c.l.b16 %v178
      %v250 = vunpack.c.l.b16 %v179
      %v251 = vunpack.c.l.b16 %v180
      %v252 = vunpack.c.l.b16 %v181
      %v253 = vunpack.c.l.b16 %v182
      %v254 = vunpack.c.l.b16 %v183
      %v255 = vunpack.c.l.b16 %v184
      %v256 = vunpack.c.l.b16 %v185
      %v257 = vunpack.c.l.b16 %v186
      %v258 = vunpack.c.l.b16 %v187
      %v259 = vunpack.c.l.b16 %v188
      %v260 = vunpack.c.l.b16 %v189
      %v261 = vunpack.c.l.b16 %v190
      %v262 = vunpack.c.l.b16 %v191
      %v263 = vunpack.c.l.b16 %v192
      %v264 = vunpack.c.l.b16 %v193
      %v265 = vunpack.c.l.b16 %v194
      %v266 = vunpack.c.l.b16 %v195
      %v267 = vunpack.c.l.b16 %v196
      %v268 = vunpack.c.l.b16 %v197
      %v269 = vunpack.c.l.b16 %v198
      %v270 = vunpack.c.l.b16 %v199
      %v271 = vunpack.c.l.b16 %v200
      %v272 = vunpack.c.l.b16 %v201
      %v273 = vunpack.c.l.b16 %v202
      %v274 = vunpack.c.l.b16 %v203
      %v275 = vunpack.c.l.b16 %v204
      %v276 = vunpack.c.l.b16 %v205
      %v277 = vunpack.c.l.b16 %v206
      %v278 = vpack.c.b16 %v247, %v246
      %v279 = vpack.c.b16 %v249, %v248
      %v280 = vpack.c.b16 %v251, %v250
      %v281 = vpack.c.b16 %v253, %v252
      %v282 = vpack.c.b16 %v255, %v254
      %v283 = vpack.c.b16 %v257, %v256
      %v284 = vpack.c.b16 %v259, %v258
      %v285 = vpack.c.b16 %v261, %v260
      %v286 = vpack.c.b16 %v263, %v262
      %v287 = vpack.c.b16 %v265, %v264
      %v288 = vpack.c.b16 %v267, %v266
      %v289 = vpack.c.b16 %v269, %v268
      %v290 = vpack.c.b16 %v271, %v270
      %v291 = vpack.c.b16 %v273, %v272
      %v292 = vpack.c.b16 %v275, %v274
      %v293 = vpack.c.b16 %v277, %v276
      %v299 = vunpack.c.l.b16 %v207
      %v300 = vunpack.c.l.b16 %v208
      %v301 = vunpack.c.l.b16 %v209
      %v302 = vunpack.c.l.b16 %v210
      %v303 = vunpack.c.l.b16 %v211
      %v304 = vpack.c.b16 %v300, %v299
      %v305 = vpack.c.b16 %v302, %v301
      %v306 = vpack.c.b16 %v303, %v303
      %vm309 = vcmask 293888
      %v311 = vsel %vm309, %v278, 0
      %v314 = vsel %vm309, %v279, 0
      %v317 = vsel %vm309, %v280, 0
      %v320 = vsel %vm309, %v281, 0
      %v323 = vsel %vm309, %v282, 0
      %v326 = vsel %vm309, %v283, 0
      %v329 = vsel %vm309, %v284, 0
      %v332 = vsel %vm309, %v285, 0
      %v335 = vsel %vm309, %v286, 0
      %v338 = vsel %vm309, %v287, 0
      %v341 = vsel %vm309, %v288, 0
      %v344 = vsel %vm309, %v289, 0
      %v347 = vsel %vm309, %v290, 0
      %v350 = vsel %vm309, %v291, 0
      %v353 = vsel %vm309, %v292, 0
      %v356 = vsel %vm309, %v293, 0
      %vm358 = vcmask 1041408
      %v360 = vsel %vm358, %v306, 0
      %362 = vmatpush.bf16.msra.mxu0 0
      %363 = vmatpush.bf16.msra.mxu0 0
      %364 = vmatpush.bf16.msra.mxu0 0
      %365 = vmatpush.bf16.msra.mxu0 0
      %366 = vmatpush.bf16.msra.mxu0 0
      %367 = vmatpush.bf16.msra.mxu0 %v360
      %368 = vmatpush.bf16.msra.mxu0 %v305
      %369 = vmatpush.bf16.msra.mxu0 %v304
      %370 = vmatmul.bf16.gmra.mxu0 %v311
      %v371 = vpop.f32.mrf.mxu0
      %v372 = vadd.f32 %v213, %v371
      %v373 = vpop.f32.mrf.mxu0
      %v374 = vadd.f32 %v213, %v373
      %375 = vmatmul.bf16.gmra.mxu0 %v314
      %v376 = vpop.f32.mrf.mxu0
      %v377 = vadd.f32 %v213, %v376
      %v378 = vpop.f32.mrf.mxu0
      %v379 = vadd.f32 %v213, %v378
      %380 = vmatmul.bf16.gmra.mxu0 %v317
      %v381 = vpop.f32.mrf.mxu0
      %v382 = vadd.f32 %v213, %v381
      %v383 = vpop.f32.mrf.mxu0
      %v384 = vadd.f32 %v213, %v383
      %385 = vmatmul.bf16.gmra.mxu0 %v320
      %v386 = vpop.f32.mrf.mxu0
      %v387 = vadd.f32 %v213, %v386
      %v388 = vpop.f32.mrf.mxu0
      %v389 = vadd.f32 %v213, %v388
      %390 = vmatmul.bf16.gmra.mxu0 %v323
      %v391 = vpop.f32.mrf.mxu0
      %v392 = vadd.f32 %v213, %v391
      %v393 = vpop.f32.mrf.mxu0
      %v394 = vadd.f32 %v213, %v393
      %395 = vmatmul.bf16.gmra.mxu0 %v326
      %v396 = vpop.f32.mrf.mxu0
      %v397 = vadd.f32 %v213, %v396
      %v398 = vpop.f32.mrf.mxu0
      %v399 = vadd.f32 %v213, %v398
      %400 = vmatmul.bf16.gmra.mxu0 %v329
      %v401 = vpop.f32.mrf.mxu0
      %v402 = vadd.f32 %v213, %v401
      %v403 = vpop.f32.mrf.mxu0
      %v404 = vadd.f32 %v213, %v403
      %405 = vmatmul.bf16.gmra.mxu0 %v332
      %v406 = vpop.f32.mrf.mxu0
      %v407 = vadd.f32 %v213, %v406
      %v408 = vpop.f32.mrf.mxu0
      %v409 = vadd.f32 %v213, %v408
      %410 = vmatmul.bf16.gmra.mxu0 %v335
      %v411 = vpop.f32.mrf.mxu0
      %v412 = vadd.f32 %v213, %v411
      %v413 = vpop.f32.mrf.mxu0
      %v414 = vadd.f32 %v213, %v413
      %415 = vmatmul.bf16.gmra.mxu0 %v338
      %v416 = vpop.f32.mrf.mxu0
      %v417 = vadd.f32 %v213, %v416
      %v418 = vpop.f32.mrf.mxu0
      %v419 = vadd.f32 %v213, %v418
      %420 = vmatmul.bf16.gmra.mxu0 %v341
      %v421 = vpop.f32.mrf.mxu0
      %v422 = vadd.f32 %v213, %v421
      %v423 = vpop.f32.mrf.mxu0
      %v424 = vadd.f32 %v213, %v423
      %425 = vmatmul.bf16.gmra.mxu0 %v344
      %v426 = vpop.f32.mrf.mxu0
      %v427 = vadd.f32 %v213, %v426
      %v428 = vpop.f32.mrf.mxu0
      %v429 = vadd.f32 %v213, %v428
      %430 = vmatmul.bf16.gmra.mxu0 %v347
      %v431 = vpop.f32.mrf.mxu0
      %v432 = vadd.f32 %v213, %v431
      %v433 = vpop.f32.mrf.mxu0
      %v434 = vadd.f32 %v213, %v433
      %435 = vmatmul.bf16.gmra.mxu0 %v350
      %v436 = vpop.f32.mrf.mxu0
      %v437 = vadd.f32 %v213, %v436
      %v438 = vpop.f32.mrf.mxu0
      %v439 = vadd.f32 %v213, %v438
      %440 = vmatmul.bf16.gmra.mxu0 %v353
      %v441 = vpop.f32.mrf.mxu0
      %v442 = vadd.f32 %v213, %v441
      %v443 = vpop.f32.mrf.mxu0
      %v444 = vadd.f32 %v213, %v443
      %445 = vmatmul.bf16.gmra.mxu0 %v356
      %v446 = vpop.f32.mrf.mxu0
      %v447 = vadd.f32 %v213, %v446
      %v448 = vpop.f32.mrf.mxu0
      %v449 = vadd.f32 %v213, %v448
      %450 = vdwg.mxu0
      %vm451 = vcmp.gt.f32.partialorder %v372, 0.0
      %vm452 = vcmp.gt.f32.partialorder %v374, 0.0
      %vm453 = vcmp.gt.f32.partialorder %v377, 0.0
      %vm454 = vcmp.gt.f32.partialorder %v379, 0.0
      %vm455 = vcmp.gt.f32.partialorder %v382, 0.0
      %vm456 = vcmp.gt.f32.partialorder %v384, 0.0
      %vm457 = vcmp.gt.f32.partialorder %v387, 0.0
      %vm458 = vcmp.gt.f32.partialorder %v389, 0.0
      %vm459 = vcmp.gt.f32.partialorder %v392, 0.0
      %vm460 = vcmp.gt.f32.partialorder %v394, 0.0
      %vm461 = vcmp.gt.f32.partialorder %v397, 0.0
      %vm462 = vcmp.gt.f32.partialorder %v399, 0.0
      %vm463 = vcmp.gt.f32.partialorder %v402, 0.0
      %vm464 = vcmp.gt.f32.partialorder %v404, 0.0
      %vm465 = vcmp.gt.f32.partialorder %v407, 0.0
      %vm466 = vcmp.gt.f32.partialorder %v409, 0.0
      %vm467 = vcmp.gt.f32.partialorder %v412, 0.0
      %vm468 = vcmp.gt.f32.partialorder %v414, 0.0
      %vm469 = vcmp.gt.f32.partialorder %v417, 0.0
      %vm470 = vcmp.gt.f32.partialorder %v419, 0.0
      %vm471 = vcmp.gt.f32.partialorder %v422, 0.0
      %vm472 = vcmp.gt.f32.partialorder %v424, 0.0
      %vm473 = vcmp.gt.f32.partialorder %v427, 0.0
      %vm474 = vcmp.gt.f32.partialorder %v429, 0.0
      %vm475 = vcmp.gt.f32.partialorder %v432, 0.0
      %vm476 = vcmp.gt.f32.partialorder %v434, 0.0
      %vm477 = vcmp.gt.f32.partialorder %v437, 0.0
      %vm478 = vcmp.gt.f32.partialorder %v439, 0.0
      %vm479 = vcmp.gt.f32.partialorder %v442, 0.0
      %vm480 = vcmp.gt.f32.partialorder %v444, 0.0
      %vm481 = vcmp.gt.f32.partialorder %v447, 0.0
      %vm482 = vcmp.gt.f32.partialorder %v449, 0.0
      %v483 = vld [vmem:[%s2 + $0x1] sm:$0x1]
      %v484 = vperm.slane %v483, 0
      %v485 = vmul.f32 %v484, %v372
      %v486 = vmul.f32 %v484, %v374
      %v487 = vmul.f32 %v484, %v377
      %v488 = vmul.f32 %v484, %v379
      %v489 = vmul.f32 %v484, %v382
      %v490 = vmul.f32 %v484, %v384
      %v491 = vmul.f32 %v484, %v387
      %v492 = vmul.f32 %v484, %v389
      %v493 = vmul.f32 %v484, %v392
      %v494 = vmul.f32 %v484, %v394
      %v495 = vmul.f32 %v484, %v397
      %v496 = vmul.f32 %v484, %v399
      %v497 = vmul.f32 %v484, %v402
      %v498 = vmul.f32 %v484, %v404
      %v499 = vmul.f32 %v484, %v407
      %v500 = vmul.f32 %v484, %v409
      %v501 = vmul.f32 %v484, %v412
      %v502 = vmul.f32 %v484, %v414
      %v503 = vmul.f32 %v484, %v417
      %v504 = vmul.f32 %v484, %v419
      %v505 = vmul.f32 %v484, %v422
      %v506 = vmul.f32 %v484, %v424
      %v507 = vmul.f32 %v484, %v427
      %v508 = vmul.f32 %v484, %v429
      %v509 = vmul.f32 %v484, %v432
      %v510 = vmul.f32 %v484, %v434
      %v511 = vmul.f32 %v484, %v437
      %v512 = vmul.f32 %v484, %v439
      %v513 = vmul.f32 %v484, %v442
      %v514 = vmul.f32 %v484, %v444
      %v515 = vmul.f32 %v484, %v447
      %v516 = vmul.f32 %v484, %v449
      %v517 = vsel %vm451, %v372, %v485
      %v518 = vsel %vm452, %v374, %v486
      %v519 = vsel %vm453, %v377, %v487
      %v520 = vsel %vm454, %v379, %v488
      %v521 = vsel %vm455, %v382, %v489
      %v522 = vsel %vm456, %v384, %v490
      %v523 = vsel %vm457, %v387, %v491
      %v524 = vsel %vm458, %v389, %v492
      %v525 = vsel %vm459, %v392, %v493
      %v526 = vsel %vm460, %v394, %v494
      %v527 = vsel %vm461, %v397, %v495
      %v528 = vsel %vm462, %v399, %v496
      %v529 = vsel %vm463, %v402, %v497
      %v530 = vsel %vm464, %v404, %v498
      %v531 = vsel %vm465, %v407, %v499
      %v532 = vsel %vm466, %v409, %v500
      %v533 = vsel %vm467, %v412, %v501
      %v534 = vsel %vm468, %v414, %v502
      %v535 = vsel %vm469, %v417, %v503
      %v536 = vsel %vm470, %v419, %v504
      %v537 = vsel %vm471, %v422, %v505
      %v538 = vsel %vm472, %v424, %v506
      %v539 = vsel %vm473, %v427, %v507
      %v540 = vsel %vm474, %v429, %v508
      %v541 = vsel %vm475, %v432, %v509
      %v542 = vsel %vm476, %v434, %v510
      %v543 = vsel %vm477, %v437, %v511
      %v544 = vsel %vm478, %v439, %v512
      %v545 = vsel %vm479, %v442, %v513
      %v546 = vsel %vm480, %v444, %v514
      %v547 = vsel %vm481, %v447, %v515
      %v548 = vsel %vm482, %v449, %v516
      %v549 = vpack.c.bf16 %v517, %v517
      %v550 = vpack.c.bf16 %v518, %v518
      %v551 = vpack.c.bf16 %v519, %v519
      %v552 = vpack.c.bf16 %v520, %v520
      %v553 = vpack.c.bf16 %v521, %v521
      %v554 = vpack.c.bf16 %v522, %v522
      %v555 = vpack.c.bf16 %v523, %v523
      %v556 = vpack.c.bf16 %v524, %v524
      %v557 = vpack.c.bf16 %v525, %v525
      %v558 = vpack.c.bf16 %v526, %v526
      %v559 = vpack.c.bf16 %v527, %v527
      %v560 = vpack.c.bf16 %v528, %v528
      %v561 = vpack.c.bf16 %v529, %v529
      %v562 = vpack.c.bf16 %v530, %v530
      %v563 = vpack.c.bf16 %v531, %v531
      %v564 = vpack.c.bf16 %v532, %v532
      %v565 = vpack.c.bf16 %v533, %v533
      %v566 = vpack.c.bf16 %v534, %v534
      %v567 = vpack.c.bf16 %v535, %v535
      %v568 = vpack.c.bf16 %v536, %v536
      %v569 = vpack.c.bf16 %v537, %v537
      %v570 = vpack.c.bf16 %v538, %v538
      %v571 = vpack.c.bf16 %v539, %v539
      %v572 = vpack.c.bf16 %v540, %v540
      %v573 = vpack.c.bf16 %v541, %v541
      %v574 = vpack.c.bf16 %v542, %v542
      %v575 = vpack.c.bf16 %v543, %v543
      %v576 = vpack.c.bf16 %v544, %v544
      %v577 = vpack.c.bf16 %v545, %v545
      %v578 = vpack.c.bf16 %v546, %v546
      %v579 = vpack.c.bf16 %v547, %v547
      %v580 = vpack.c.bf16 %v548, %v548
      %581 = vst [vmem:[%s172] sm:$0xf] %v549
      %582 = vst [vmem:[%s172 + $0x4] sm:$0xf] %v550
      %583 = vst [vmem:[%s172 + $0x8] sm:$0xf] %v551
      %584 = vst [vmem:[%s172 + $0xc] sm:$0xf] %v552
      %585 = vst [vmem:[%s172 + $0x10] sm:$0xf] %v553
      %586 = vst [vmem:[%s172 + $0x14] sm:$0xf] %v554
      %587 = vst [vmem:[%s172 + $0x18] sm:$0xf] %v555
      %588 = vst [vmem:[%s172 + $0x1c] sm:$0xf] %v556
      %589 = vst [vmem:[%s172 + $0x20] sm:$0xf] %v557
      %590 = vst [vmem:[%s172 + $0x24] sm:$0xf] %v558
      %591 = vst [vmem:[%s172 + $0x28] sm:$0xf] %v559
      %592 = vst [vmem:[%s172 + $0x2c] sm:$0xf] %v560
      %593 = vst [vmem:[%s172 + $0x30] sm:$0xf] %v561
      %594 = vst [vmem:[%s172 + $0x34] sm:$0xf] %v562
      %595 = vst [vmem:[%s172 + $0x38] sm:$0xf] %v563
      %596 = vst [vmem:[%s172 + $0x3c] sm:$0xf] %v564
      %597 = vst [vmem:[%s172 + $0x40] sm:$0xf] %v565
      %598 = vst [vmem:[%s172 + $0x44] sm:$0xf] %v566
      %599 = vst [vmem:[%s172 + $0x48] sm:$0xf] %v567
      %600 = vst [vmem:[%s172 + $0x4c] sm:$0xf] %v568
      %601 = vst [vmem:[%s172 + $0x50] sm:$0xf] %v569
      %602 = vst [vmem:[%s172 + $0x54] sm:$0xf] %v570
      %603 = vst [vmem:[%s172 + $0x58] sm:$0xf] %v571
      %604 = vst [vmem:[%s172 + $0x5c] sm:$0xf] %v572
      %605 = vst [vmem:[%s172 + $0x60] sm:$0xf] %v573
      %606 = vst [vmem:[%s172 + $0x64] sm:$0xf] %v574
      %607 = vst [vmem:[%s172 + $0x68] sm:$0xf] %v575
      %608 = vst [vmem:[%s172 + $0x6c] sm:$0xf] %v576
      %609 = vst [vmem:[%s172 + $0x70] sm:$0xf] %v577
      %610 = vst [vmem:[%s172 + $0x74] sm:$0xf] %v578
      %611 = vst [vmem:[%s172 + $0x78] sm:$0xf] %v579
      %612 = vst [vmem:[%s172 + $0x7c] sm:$0xf] %v580
      %s613 = smul.u32 32, %s14
      %p614 = scmp.lt.s32.totalorder %s613, 63
      %s615 = scalar_select %p614, %s613, 63
      %s616 = smul.addr %s615, 4
      %s617 = scalar_lea.vmem %s3, %s616
      // Predicated region
      $region33: #{conv_block_forward.1} parent=31 // pred_check
        %p618 = pneg %p100
      $region34: #{conv_block_forward.1} parent=31 // pred_check_branch
        %620 = sbr.rel (%p618) target = $region36
      $region35: #{conv_block_forward.1} parent=31 // pred_region
        %s621 = smul.u32 32, %s14
      $region36: #{conv_block_forward.1} parent=31 // pred_fallthru
        _
    $region32: #{conv_block_forward.1} parent=5 // pred_fallthru
      _
    %p622 = scmp.le.s32.totalorder 2, %s9
    // Predicated region
    $region37: #{conv_block_forward.1} parent=5 // pred_check
      %p623 = pneg %p622
    $region38: #{conv_block_forward.1} parent=5 // pred_check_branch
      %625 = sbr.rel (%p623) target = $region40
    $region39: #{conv_block_forward.1} parent=5 // pred_region
      %s626 = ssub.s32 %s9, 2
      // Predicated region
      $region41: #{conv_block_forward.1} parent=39 // pred_check
        %p627 = pneg %p106
      $region42: #{conv_block_forward.1} parent=39 // pred_check_branch
        %629 = sbr.rel (%p627) target = $region44
      $region43: #{conv_block_forward.1} parent=39 // pred_region
        %s630 = smul.u32 32, %s15
        %p631 = scmp.lt.s32.totalorder %s630, 63
        %s632 = scalar_select %p631, %s630, 63
        %s633 = smul.addr %s632, 4
        %s634 = scalar_lea.vmem %s3, %s633
      $region44: #{conv_block_forward.1} parent=39 // pred_fallthru
        _
    $region40: #{conv_block_forward.1} parent=5 // pred_fallthru
      _
  $region6: #{conv_block_forward.1} parent=0 // loop_footer
    %s13 = sadd.s32 1, %s9
  $region7: #{conv_block_forward.1} parent=0 // loop_footer_branch
    %8 = sbr.rel target = $region3
  $region8: #{conv_block_forward.1} parent=0 // loop_exit
    _

</llo_original>
